<compile_context>
chip_gen: v5e
topology: v5e:2x2
jax: 0.10.0
libtpu: 0.0.40
codegen_flags: <defaults>
</compile_context>

<pallas_src>
import functools
import math

import jax
import jax.numpy as jnp
import numpy as np
from jax import lax
from jax.experimental import pallas as pl
from jax.experimental.pallas import tpu as pltpu

TARGET_SR = 48000
FRAME = 128   # synthetic embedder frame size (lanes)
HID = 128     # synthetic embedder hidden width (full 128-lane vregs / MXU columns)
EMB = 512     # CLAP embedding dim


def _round_up(x, m):
    return ((x + m - 1) // m) * m


# ----------------------------------------------------------------------------
# Resample: torchaudio.functional.resample (sinc_interp_hann) semantics,
# reformulated as a banded MXU matmul, tiled over the time axis.
# ----------------------------------------------------------------------------
def _make_sinc_resample_kernel(orig, new, lowpass_filter_width=6, rolloff=0.99):
    """Reproduces torchaudio._get_sinc_resample_kernel (hann window)."""
    base_freq = min(orig, new) * rolloff
    width = int(math.ceil(lowpass_filter_width * orig / base_freq))
    idx = np.arange(-width, width + orig, dtype=np.float64) / orig          # (K,)
    t = (-np.arange(new, dtype=np.float64) / new)[:, None] + idx[None, :]   # (new, K)
    t = t * base_freq
    t = np.clip(t, -lowpass_filter_width, lowpass_filter_width)
    window = np.cos(t * np.pi / lowpass_filter_width / 2.0) ** 2
    t = t * np.pi
    scale = base_freq / orig
    safe_t = np.where(t == 0.0, 1.0, t)
    kern = np.where(t == 0.0, 1.0, np.sin(safe_t) / safe_t) * window * scale
    return kern.astype(np.float32), width


def _build_band_matrices(kern, tile_t, halo_blk):
    """Constant band matrices so that
         out_tile = cur_tile @ band_cur + next_tile[:, :halo_blk] @ band_nxt
       reproduces the interleaved polyphase FIR:
         out[b, j*new + p] = sum_k kern[p, k] * padded[b, tile_off + j + k]."""
    new, n_taps = kern.shape
    band_cur = np.zeros((tile_t, tile_t * new), dtype=np.float32)
    band_nxt = np.zeros((halo_blk, tile_t * new), dtype=np.float32)
    for j in range(tile_t):
        for p in range(new):
            col = j * new + p
            for k in range(n_taps):
                r = j + k
                if r < tile_t:
                    band_cur[r, col] = kern[p, k]
                else:
                    band_nxt[r - tile_t, col] = kern[p, k]
    return band_cur, band_nxt


def _resample_kernel(cur_ref, nxt_ref, bcur_ref, bnxt_ref, out_ref, *, halo_blk):
    # One MXU matmul per tile (plus a small halo matmul); output is already
    # interleaved (j*new + p) and lane-dense (TILE_T*new multiple of 128).
    acc = jnp.dot(cur_ref[...], bcur_ref[...], preferred_element_type=jnp.float32)
    acc = acc + jnp.dot(nxt_ref[:, :halo_blk], bnxt_ref[...],
                        preferred_element_type=jnp.float32)
    out_ref[...] = acc


def resample_pallas(wav, orig_freq, new_freq, tile_t=256):
    g = math.gcd(int(orig_freq), int(new_freq))
    orig, new = orig_freq // g, new_freq // g
    if orig == new:
        return wav
    # TODO(synk): strided polyphase taps (reduced orig_freq > 1) not implemented;
    #   sr=16000 -> 48000 reduces to orig=1, new=3.
    assert orig == 1, "only integer upsampling (reduced orig_freq == 1) is implemented"

    kern, width = _make_sinc_resample_kernel(orig, new)
    n_taps = kern.shape[1]
    batch, length = wav.shape
    target_length = int(math.ceil(new * length / orig))

    assert tile_t % 128 == 0 and (tile_t * new) % 128 == 0
    halo_blk = min(tile_t, 128)
    assert n_taps - 1 <= halo_blk

    n_out_frames = length                       # each frame emits `new` output samples
    n_tiles = pl.cdiv(n_out_frames, tile_t)
    padded_len = (n_tiles + 1) * tile_t         # +1 tile so the halo spec never runs off the end
    padded = jnp.pad(wav.astype(jnp.float32),
                     ((0, 0), (width, padded_len - length - width)))

    band_cur, band_nxt = _build_band_matrices(kern, tile_t, halo_blk)

    out = pl.pallas_call(
        functools.partial(_resample_kernel, halo_blk=halo_blk),
        grid=(n_tiles,),
        in_specs=[
            pl.BlockSpec((batch, tile_t), lambda i: (0, i)),         # current tile
            pl.BlockSpec((batch, tile_t), lambda i: (0, i + 1)),     # next tile (halo source)
            pl.BlockSpec((tile_t, tile_t * new), lambda i: (0, 0)),  # resident band matrix
            pl.BlockSpec((halo_blk, tile_t * new), lambda i: (0, 0)),
        ],
        out_specs=pl.BlockSpec((batch, tile_t * new), lambda i: (0, i)),
        out_shape=jax.ShapeDtypeStruct((batch, n_tiles * tile_t * new), jnp.float32),
        compiler_params=pltpu.CompilerParams(dimension_semantics=("parallel",)),
    )(padded, padded, jnp.asarray(band_cur), jnp.asarray(band_nxt))

    return out[:, :target_length]


# ----------------------------------------------------------------------------
# Fused synthetic CLAP-style embedder (both streams) + MSE loss.
# ----------------------------------------------------------------------------
def _embed_mse_kernel(frames_ref, w1_ref, w2_ref, out_ref, acc_ref, *,
                      n_frames, batch):
    c = pl.program_id(0)

    @pl.when(c == 0)
    def _():
        acc_ref[...] = jnp.zeros_like(acc_ref)

    f = frames_ref[...]                                                 # (2B, FCHUNK, FRAME)
    h = jnp.tanh(jnp.einsum("bfd,dh->bfh", f, w1_ref[...],
                            preferred_element_type=jnp.float32))        # (2B, FCHUNK, HID)
    acc_ref[...] += jnp.sum(h, axis=1)                                  # running frame sum

    @pl.when(c == pl.num_programs(0) - 1)
    def _():
        pooled = acc_ref[...] * (1.0 / n_frames)                        # mean pool
        e = jnp.dot(pooled, w2_ref[...],
                    preferred_element_type=jnp.float32)                 # (2B, EMB)
        inv_nrm = lax.rsqrt(
            jnp.maximum(jnp.sum(e * e, axis=-1, keepdims=True), 1e-24))
        e = e * inv_nrm                                                 # L2 normalize (EUP rsqrt)
        d = e[:batch, :] - e[batch:, :]
        out_ref[...] = jnp.mean(d * d, keepdims=True)                   # (1, 1) scalar MSE


def embed_mse_pallas(wav_pair, w1, w2, fchunk=256):
    """wav_pair: (2B, L) stacked (input; target) resampled waveforms -> scalar MSE."""
    nb, length = wav_pair.shape
    batch = nb // 2
    n_frames = length // FRAME
    assert n_frames >= 1, "audio too short for the synthetic embedder"

    fchunk = min(fchunk, _round_up(n_frames, 8))
    nfp = _round_up(n_frames, fchunk)

    frames = wav_pair[:, :n_frames * FRAME].reshape(nb, n_frames, FRAME)
    if nfp != n_frames:
        # zero frames contribute tanh(0 @ w1) = 0 to the sum; mean divides by real n_frames
        frames = jnp.pad(frames, ((0, 0), (0, nfp - n_frames), (0, 0)))

    out = pl.pallas_call(
        functools.partial(_embed_mse_kernel, n_frames=n_frames, batch=batch),
        grid=(nfp // fchunk,),
        in_specs=[
            pl.BlockSpec((nb, fchunk, FRAME), lambda c: (0, c, 0)),
            pl.BlockSpec((FRAME, HID), lambda c: (0, 0)),   # resident weights
            pl.BlockSpec((HID, EMB), lambda c: (0, 0)),
        ],
        out_specs=pl.BlockSpec((1, 1), lambda c: (0, 0)),
        out_shape=jax.ShapeDtypeStruct((1, 1), jnp.float32),
        scratch_shapes=[pltpu.VMEM((nb, HID), jnp.float32)],
        compiler_params=pltpu.CompilerParams(dimension_semantics=("arbitrary",)),
    )(frames, w1, w2)
    return out[0, 0]


# ----------------------------------------------------------------------------
# CLAPLoss.forward
# ----------------------------------------------------------------------------
def clap_loss(input_wav, target_wav, sr, w1, w2):
    # torch.squeeze(x, dim=[1]) : (B, 1, T) -> (B, T)
    x = jnp.squeeze(input_wav, axis=1)
    y = jnp.squeeze(target_wav, axis=1)
    # stack input & target so resample and embedding each run once (weights
    # loaded once, better sublane occupancy, fewer kernel launches)
    stacked = jnp.concatenate([x, y], axis=0)              # (2B, T)
    resampled = resample_pallas(stacked, sr, TARGET_SR)    # (2B, 3T) interleaved, lane-dense
    return embed_mse_pallas(resampled, w1, w2)             # scalar (frozen embedder: no_grad in torch)


if __name__ == "__main__":
    SR = 16000
    B, T = 2, 256

    key = jax.random.PRNGKey(0)
    k_in, k_tar, k_w1, k_w2 = jax.random.split(key, 4)
    input_wav = jax.random.normal(k_in, (B, 1, T), dtype=jnp.float32)
    target_wav = jax.random.normal(k_tar, (B, 1, T), dtype=jnp.float32)

    # deterministic synthetic embedder parameters
    w1 = jax.random.normal(k_w1, (FRAME, HID), dtype=jnp.float32) / math.sqrt(FRAME)
    w2 = jax.random.normal(k_w2, (HID, EMB), dtype=jnp.float32) / math.sqrt(HID)

    loss = clap_loss(input_wav, target_wav, SR, w1, w2)
    jax.block_until_ready(loss)
    assert loss.shape == () and jnp.isfinite(loss)
    print("KERNEL_OK")
</pallas_src>

<mosaic_0001>
module attributes {stable_mosaic.version = 11 : i64} {
  func.func @_resample_kernel(%arg0: i32, %arg1: memref<4x256xf32, #tpu.memory_space<vmem>>, %arg2: memref<4x256xf32, #tpu.memory_space<vmem>>, %arg3: memref<256x768xf32, #tpu.memory_space<vmem>>, %arg4: memref<128x768xf32, #tpu.memory_space<vmem>>, %arg5: memref<4x768xf32, #tpu.memory_space<vmem>>) attributes {dimension_semantics = [#tpu.dimension_semantics<parallel>], iteration_bounds = array<i64: 1>, scalar_prefetch = 0 : i64, scratch_operands = 0 : i64, tpu.core_type = #tpu.core_type<tc>, window_params = [{transform_indices = @transform_0, window_bounds = array<i64: 4, 256>}, {transform_indices = @transform_1, window_bounds = array<i64: 4, 256>}, {pipeline_mode = #tpu.pipeline_mode<synchronous>, transform_indices = @transform_2, window_bounds = array<i64: 256, 768>}, {pipeline_mode = #tpu.pipeline_mode<synchronous>, transform_indices = @transform_3, window_bounds = array<i64: 128, 768>}, {transform_indices = @transform_4, window_bounds = array<i64: 4, 768>}]} {
    %c0 = arith.constant 0 : index
    %c0_0 = arith.constant 0 : index
    %0 = vector.load %arg1[%c0, %c0_0] : memref<4x256xf32, #tpu.memory_space<vmem>>, vector<4x256xf32>
    %c0_1 = arith.constant 0 : index
    %c0_2 = arith.constant 0 : index
    %1 = vector.load %arg3[%c0_1, %c0_2] : memref<256x768xf32, #tpu.memory_space<vmem>>, vector<256x768xf32>
    %cst = arith.constant dense<0.000000e+00> : vector<4x768xf32>
    %2 = tpu.matmul %0, %1, %cst {dimension_numbers = #tpu.dot_dimension_numbers<[1], [0], [0], [1], [0, 0, 1, 1], [], []>} : vector<4x256xf32>, vector<256x768xf32>, vector<4x768xf32> -> vector<4x768xf32>
    %c0_3 = arith.constant 0 : index
    %c0_4 = arith.constant 0 : index
    %3 = vector.load %arg2[%c0_3, %c0_4] : memref<4x256xf32, #tpu.memory_space<vmem>>, vector<4x128xf32>
    %c0_5 = arith.constant 0 : index
    %c0_6 = arith.constant 0 : index
    %4 = vector.load %arg4[%c0_5, %c0_6] : memref<128x768xf32, #tpu.memory_space<vmem>>, vector<128x768xf32>
    %cst_7 = arith.constant dense<0.000000e+00> : vector<4x768xf32>
    %5 = tpu.matmul %3, %4, %cst_7 {dimension_numbers = #tpu.dot_dimension_numbers<[1], [0], [0], [1], [0, 0, 1, 1], [], []>} : vector<4x128xf32>, vector<128x768xf32>, vector<4x768xf32> -> vector<4x768xf32>
    %6 = arith.addf %2, %5 : vector<4x768xf32>
    %c0_8 = arith.constant 0 : index
    %c0_9 = arith.constant 0 : index
    %7 = vector.load %arg5[%c0_8, %c0_9] : memref<4x768xf32, #tpu.memory_space<vmem>>, vector<4x768xf32>
    tpu.vector_store %arg5[%c0_8, %c0_9], %6 {strides = array<i32>} : memref<4x768xf32, #tpu.memory_space<vmem>>, vector<4x768xf32>,
    return
  }
  func.func @transform_0(%arg0: i32) -> (i32, i32) {
    %c0_i32 = arith.constant 0 : i32
    %c0_i32_0 = arith.constant 0 : i32
    return %c0_i32, %arg0 : i32, i32
  }
  func.func @transform_1(%arg0: i32) -> (i32, i32) {
    %c1_i32 = arith.constant 1 : i32
    %0 = arith.addi %arg0, %c1_i32 : i32
    %c0_i32 = arith.constant 0 : i32
    %c0_i32_0 = arith.constant 0 : i32
    return %c0_i32, %0 : i32, i32
  }
  func.func @transform_2(%arg0: i32) -> (i32, i32) {
    %c0_i32 = arith.constant 0 : i32
    %c0_i32_0 = arith.constant 0 : i32
    %c0_i32_1 = arith.constant 0 : i32
    return %c0_i32, %c0_i32_0 : i32, i32
  }
  func.func @transform_3(%arg0: i32) -> (i32, i32) {
    %c0_i32 = arith.constant 0 : i32
    %c0_i32_0 = arith.constant 0 : i32
    %c0_i32_1 = arith.constant 0 : i32
    return %c0_i32, %c0_i32_0 : i32, i32
  }
  func.func @transform_4(%arg0: i32) -> (i32, i32) {
    %c0_i32 = arith.constant 0 : i32
    %c0_i32_0 = arith.constant 0 : i32
    return %c0_i32, %arg0 : i32, i32
  }
}

</mosaic_0001>

<llo_original>
// kernel: tpu_custom_call.1
$region0: #{tpu_custom_call.1}
  #allocation0 [shape = 'u32[]', space=smem, size = 0x4, offset = 0x4, fixed_abs, tag = 'smem constant byte address 0x4 - core index']
  #allocation1 [shape = 'u32[72,128]{1,0:T(1,128)}', space=vmem, size = 0x9000, scoped, tag = 'internal scratch']
  %s0 = inlined_call_operand.hbm [shape: f32[4,512], index: 0, kind: input, shape index: {}]
  %s1 = inlined_call_operand.hbm [shape: f32[4,512], index: 1, kind: input, shape index: {}]
  %s2 = inlined_call_operand.hbm [shape: f32[256,768], index: 2, kind: input, shape index: {}]
  %s3 = inlined_call_operand.hbm [shape: f32[128,768], index: 3, kind: input, shape index: {}]
  %s4 = inlined_call_operand.hbm [shape: f32[4,768], index: 4, kind: output, shape index: {}]
  %s5 = sld [smem:[#allocation0]]
  $region42: #{tpu_custom_call.1} parent=0
    _
  %s7 = ssub.s32 1, %s5
  %s8 = scalar_select 0, %s7, %s5
  $region1: #{tpu_custom_call.1} parent=0
    #allocation2 [shape = 'u8[4096]{0}', space=vmem, size = 0x1000, scoped, tag = 'input window, operand 0, single buffered']
    #allocation3 [shape = 's32[1]{0}', space=sflag, size = 0x4, scoped, tag = 'scoped memory for tpu_custom_call.1']
    #allocation4 [shape = 's32[1]{0}', space=sflag, size = 0x4, scoped, tag = 'scoped memory for tpu_custom_call.1']
    #allocation5 [shape = 'u8[4096]{0}', space=vmem, size = 0x1000, scoped, tag = 'input window, operand 1, single buffered']
    #allocation6 [shape = 's32[1]{0}', space=sflag, size = 0x4, scoped, tag = 'scoped memory for tpu_custom_call.1']
    #allocation7 [shape = 'u8[786432]{0}', space=vmem, size = 0xc0000, scoped, tag = 'input window, operand 2, single buffered']
    #allocation8 [shape = 'u8[393216]{0}', space=vmem, size = 0x60000, scoped, tag = 'input window, operand 3, single buffered']
    #allocation9 [shape = 's32[1]{0}', space=sflag, size = 0x4, scoped, tag = 'scoped memory for tpu_custom_call.1']
    #allocation10 [shape = 'u8[12288]{0}', space=vmem, size = 0x3000, scoped, tag = 'output window, operand 0, single buffered']
    %9 = vsyncpa [#allocation3], 0
    %10 = vsyncpa [#allocation6], 0
    %11 = vsyncpa [#allocation9], 0
    %12 = vsyncpa [#allocation4], 0
    // Predicated region
    $region2: #{tpu_custom_call.1} parent=1 // pred_check
      _
    $region3: #{tpu_custom_call.1} parent=1 // pred_check_branch
      %14 = sbr.rel (0) target = $region5
    $region4: #{tpu_custom_call.1} parent=1 // pred_region
      %16 = vsyncadd [#allocation3], 0
      %s18 = sshll.u32 %s0, 4
      %s19 = int_to_ptr.hbm [resolvable:$true] %s18
      %s20 = sshll.u32 [#allocation2], 4
      %s21 = int_to_ptr.vmem [resolvable:$true] %s20
      %23 = dma.hbm_to_vmem [thread:$0]  %s19, 128, %s21, [#allocation3]
    $region5: #{tpu_custom_call.1} parent=1 // pred_fallthru
      _
    // Predicated region
    $region6: #{tpu_custom_call.1} parent=1 // pred_check
      _
    $region7: #{tpu_custom_call.1} parent=1 // pred_check_branch
      %25 = sbr.rel (0) target = $region9
    $region8: #{tpu_custom_call.1} parent=1 // pred_region
      %s26 = sadd.s32 0, 1
      %s27 = smul.u32 2, %s26
      %29 = vsyncadd [#allocation6], 0
      %s30 = smul.addr %s27, 4
      %s31 = scalar_lea.hbm %s1, %s30
      %s33 = sshll.u32 %s31, 4
      %s34 = int_to_ptr.hbm [resolvable:$true] %s33
      %s35 = sshll.u32 [#allocation5], 4
      %s36 = int_to_ptr.vmem [resolvable:$true] %s35
      %38 = dma.hbm_to_vmem [thread:$0]  %s34, 128, %s36, [#allocation6]
    $region9: #{tpu_custom_call.1} parent=1 // pred_fallthru
      _
    // Predicated region
    $region10: #{tpu_custom_call.1} parent=1 // pred_check
      _
    $region11: #{tpu_custom_call.1} parent=1 // pred_check_branch
      %40 = sbr.rel (0) target = $region13
    $region12: #{tpu_custom_call.1} parent=1 // pred_region
      %42 = vsyncadd [#allocation6], 0
      %s43 = sshll.u32 %s2, 4
      %s44 = int_to_ptr.hbm [resolvable:$true] %s43
      %s45 = sshll.u32 [#allocation7], 4
      %s46 = int_to_ptr.vmem [resolvable:$true] %s45
      %51 = dma.hbm_to_vmem [thread:$0]  %s44, 24576, %s46, [#allocation6], 768, 768, 48
    $region13: #{tpu_custom_call.1} parent=1 // pred_fallthru
      _
    // Predicated region
    $region14: #{tpu_custom_call.1} parent=1 // pred_check
      _
    $region15: #{tpu_custom_call.1} parent=1 // pred_check_branch
      %53 = sbr.rel (0) target = $region17
    $region16: #{tpu_custom_call.1} parent=1 // pred_region
      %55 = vsyncadd [#allocation9], 0
      %s56 = sshll.u32 %s3, 4
      %s57 = int_to_ptr.hbm [resolvable:$true] %s56
      %s58 = sshll.u32 [#allocation8], 4
      %s59 = int_to_ptr.vmem [resolvable:$true] %s58
      %64 = dma.hbm_to_vmem [thread:$0]  %s57, 12288, %s59, [#allocation9], 768, 768, 48
    $region17: #{tpu_custom_call.1} parent=1 // pred_fallthru
      _
    // Predicated region
    $region18: #{tpu_custom_call.1} parent=1 // pred_check
      _
    $region19: #{tpu_custom_call.1} parent=1 // pred_check_branch
      %66 = sbr.rel (0) target = $region21
    $region20: #{tpu_custom_call.1} parent=1 // pred_region
      %68 = dma.done [#allocation3], 128
    $region21: #{tpu_custom_call.1} parent=1 // pred_fallthru
      _
    // Predicated region
    $region22: #{tpu_custom_call.1} parent=1 // pred_check
      _
    $region23: #{tpu_custom_call.1} parent=1 // pred_check_branch
      %70 = sbr.rel (0) target = $region25
    $region24: #{tpu_custom_call.1} parent=1 // pred_region
      %72 = dma.done [#allocation6], 128
    $region25: #{tpu_custom_call.1} parent=1 // pred_fallthru
      _
    // Predicated region
    $region26: #{tpu_custom_call.1} parent=1 // pred_check
      _
    $region27: #{tpu_custom_call.1} parent=1 // pred_check_branch
      %74 = sbr.rel (0) target = $region29
    $region28: #{tpu_custom_call.1} parent=1 // pred_region
      %76 = dma.done [#allocation6], 24576
    $region29: #{tpu_custom_call.1} parent=1 // pred_fallthru
      _
    // Predicated region
    $region30: #{tpu_custom_call.1} parent=1 // pred_check
      _
    $region31: #{tpu_custom_call.1} parent=1 // pred_check_branch
      %78 = sbr.rel (0) target = $region33
    $region32: #{tpu_custom_call.1} parent=1 // pred_region
      %80 = dma.done [#allocation9], 12288
    $region33: #{tpu_custom_call.1} parent=1 // pred_fallthru
      _
    %s81 = sadd.s32 0, 1
    %s82 = smul.u32 2, %s81
    %v83 = vld [vmem:[#allocation2] sm:$0xff]
    %v84 = vld [vmem:[#allocation7] sm:$0xff]
    %v85 = vld [vmem:[#allocation7 + $0x8] sm:$0xff]
    %v86 = vld [vmem:[#allocation7 + $0x10] sm:$0xff]
    %v87 = vld [vmem:[#allocation7 + $0x18] sm:$0xff]
    %v88 = vld [vmem:[#allocation7 + $0x20] sm:$0xff]
    %v89 = vld [vmem:[#allocation7 + $0x28] sm:$0xff]
    %v90 = vld [vmem:[#allocation7 + $0x30] sm:$0xff]
    %v91 = vld [vmem:[#allocation7 + $0x38] sm:$0xff]
    %v92 = vld [vmem:[#allocation7 + $0x40] sm:$0xff]
    %v93 = vld [vmem:[#allocation7 + $0x48] sm:$0xff]
    %v94 = vld [vmem:[#allocation7 + $0x50] sm:$0xff]
    %v95 = vld [vmem:[#allocation7 + $0x58] sm:$0xff]
    %v96 = vld [vmem:[#allocation7 + $0x60] sm:$0xff]
    %v97 = vld [vmem:[#allocation7 + $0x68] sm:$0xff]
    %v98 = vld [vmem:[#allocation7 + $0x70] sm:$0xff]
    %v99 = vld [vmem:[#allocation7 + $0x78] sm:$0xff]
    %v100 = vld [vmem:[#allocation7 + $0x80] sm:$0xff]
    %v101 = vld [vmem:[#allocation7 + $0x88] sm:$0xff]
    %v102 = vld [vmem:[#allocation7 + $0x90] sm:$0xff]
    %v103 = vld [vmem:[#allocation7 + $0x98] sm:$0xff]
    %v104 = vld [vmem:[#allocation7 + $0xa0] sm:$0xff]
    %v105 = vld [vmem:[#allocation7 + $0xa8] sm:$0xff]
    %v106 = vld [vmem:[#allocation7 + $0xb0] sm:$0xff]
    %v107 = vld [vmem:[#allocation7 + $0xb8] sm:$0xff]
    %v108 = vld [vmem:[#allocation7 + $0xc0] sm:$0xff]
    %v109 = vld [vmem:[#allocation7 + $0xc8] sm:$0xff]
    %v110 = vld [vmem:[#allocation7 + $0xd0] sm:$0xff]
    %v111 = vld [vmem:[#allocation7 + $0xd8] sm:$0xff]
    %v112 = vld [vmem:[#allocation7 + $0xe0] sm:$0xff]
    %v113 = vld [vmem:[#allocation7 + $0xe8] sm:$0xff]
    %v114 = vld [vmem:[#allocation7 + $0xf0] sm:$0xff]
    %v115 = vld [vmem:[#allocation7 + $0xf8] sm:$0xff]
    %v116 = vld [vmem:[#allocation7 + $0x100] sm:$0xff]
    %v117 = vld [vmem:[#allocation7 + $0x108] sm:$0xff]
    %v118 = vld [vmem:[#allocation7 + $0x110] sm:$0xff]
    %v119 = vld [vmem:[#allocation7 + $0x118] sm:$0xff]
    %v120 = vld [vmem:[#allocation7 + $0x120] sm:$0xff]
    %v121 = vld [vmem:[#allocation7 + $0x128] sm:$0xff]
    %v122 = vld [vmem:[#allocation7 + $0x130] sm:$0xff]
    %v123 = vld [vmem:[#allocation7 + $0x138] sm:$0xff]
    %v124 = vld [vmem:[#allocation7 + $0x140] sm:$0xff]
    %v125 = vld [vmem:[#allocation7 + $0x148] sm:$0xff]
    %v126 = vld [vmem:[#allocation7 + $0x150] sm:$0xff]
    %v127 = vld [vmem:[#allocation7 + $0x158] sm:$0xff]
    %v128 = vld [vmem:[#allocation7 + $0x160] sm:$0xff]
    %v129 = vld [vmem:[#allocation7 + $0x168] sm:$0xff]
    %v130 = vld [vmem:[#allocation7 + $0x170] sm:$0xff]
    %v131 = vld [vmem:[#allocation7 + $0x178] sm:$0xff]
    %v132 = vld [vmem:[#allocation7 + $0x180] sm:$0xff]
    %v133 = vld [vmem:[#allocation7 + $0x188] sm:$0xff]
    %v134 = vld [vmem:[#allocation7 + $0x190] sm:$0xff]
    %v135 = vld [vmem:[#allocation7 + $0x198] sm:$0xff]
    %v136 = vld [vmem:[#allocation7 + $0x1a0] sm:$0xff]
    %v137 = vld [vmem:[#allocation7 + $0x1a8] sm:$0xff]
    %v138 = vld [vmem:[#allocation7 + $0x1b0] sm:$0xff]
    %v139 = vld [vmem:[#allocation7 + $0x1b8] sm:$0xff]
    %v140 = vld [vmem:[#allocation7 + $0x1c0] sm:$0xff]
    %v141 = vld [vmem:[#allocation7 + $0x1c8] sm:$0xff]
    %v142 = vld [vmem:[#allocation7 + $0x1d0] sm:$0xff]
    %v143 = vld [vmem:[#allocation7 + $0x1d8] sm:$0xff]
    %v144 = vld [vmem:[#allocation7 + $0x1e0] sm:$0xff]
    %v145 = vld [vmem:[#allocation7 + $0x1e8] sm:$0xff]
    %v146 = vld [vmem:[#allocation7 + $0x1f0] sm:$0xff]
    %v147 = vld [vmem:[#allocation7 + $0x1f8] sm:$0xff]
    %v148 = vld [vmem:[#allocation7 + $0x200] sm:$0xff]
    %v149 = vld [vmem:[#allocation7 + $0x208] sm:$0xff]
    %v150 = vld [vmem:[#allocation7 + $0x210] sm:$0xff]
    %v151 = vld [vmem:[#allocation7 + $0x218] sm:$0xff]
    %v152 = vld [vmem:[#allocation7 + $0x220] sm:$0xff]
    %v153 = vld [vmem:[#allocation7 + $0x228] sm:$0xff]
    %v154 = vld [vmem:[#allocation7 + $0x230] sm:$0xff]
    %v155 = vld [vmem:[#allocation7 + $0x238] sm:$0xff]
    %v156 = vld [vmem:[#allocation7 + $0x240] sm:$0xff]
    %v157 = vld [vmem:[#allocation7 + $0x248] sm:$0xff]
    %v158 = vld [vmem:[#allocation7 + $0x250] sm:$0xff]
    %v159 = vld [vmem:[#allocation7 + $0x258] sm:$0xff]
    %v160 = vld [vmem:[#allocation7 + $0x260] sm:$0xff]
    %v161 = vld [vmem:[#allocation7 + $0x268] sm:$0xff]
    %v162 = vld [vmem:[#allocation7 + $0x270] sm:$0xff]
    %v163 = vld [vmem:[#allocation7 + $0x278] sm:$0xff]
    %v164 = vld [vmem:[#allocation7 + $0x280] sm:$0xff]
    %v165 = vld [vmem:[#allocation7 + $0x288] sm:$0xff]
    %v166 = vld [vmem:[#allocation7 + $0x290] sm:$0xff]
    %v167 = vld [vmem:[#allocation7 + $0x298] sm:$0xff]
    %v168 = vld [vmem:[#allocation7 + $0x2a0] sm:$0xff]
    %v169 = vld [vmem:[#allocation7 + $0x2a8] sm:$0xff]
    %v170 = vld [vmem:[#allocation7 + $0x2b0] sm:$0xff]
    %v171 = vld [vmem:[#allocation7 + $0x2b8] sm:$0xff]
    %v172 = vld [vmem:[#allocation7 + $0x2c0] sm:$0xff]
    %v173 = vld [vmem:[#allocation7 + $0x2c8] sm:$0xff]
    %v174 = vld [vmem:[#allocation7 + $0x2d0] sm:$0xff]
    %v175 = vld [vmem:[#allocation7 + $0x2d8] sm:$0xff]
    %v176 = vld [vmem:[#allocation7 + $0x2e0] sm:$0xff]
    %v177 = vld [vmem:[#allocation7 + $0x2e8] sm:$0xff]
    %v178 = vld [vmem:[#allocation7 + $0x2f0] sm:$0xff]
    %v179 = vld [vmem:[#allocation7 + $0x2f8] sm:$0xff]
    %v180 = vld [vmem:[#allocation7 + $0x300] sm:$0xff]
    %v181 = vld [vmem:[#allocation7 + $0x308] sm:$0xff]
    %v182 = vld [vmem:[#allocation7 + $0x310] sm:$0xff]
    %v183 = vld [vmem:[#allocation7 + $0x318] sm:$0xff]
    %v184 = vld [vmem:[#allocation7 + $0x320] sm:$0xff]
    %v185 = vld [vmem:[#allocation7 + $0x328] sm:$0xff]
    %v186 = vld [vmem:[#allocation7 + $0x330] sm:$0xff]
    %v187 = vld [vmem:[#allocation7 + $0x338] sm:$0xff]
    %v188 = vld [vmem:[#allocation7 + $0x340] sm:$0xff]
    %v189 = vld [vmem:[#allocation7 + $0x348] sm:$0xff]
    %v190 = vld [vmem:[#allocation7 + $0x350] sm:$0xff]
    %v191 = vld [vmem:[#allocation7 + $0x358] sm:$0xff]
    %v192 = vld [vmem:[#allocation7 + $0x360] sm:$0xff]
    %v193 = vld [vmem:[#allocation7 + $0x368] sm:$0xff]
    %v194 = vld [vmem:[#allocation7 + $0x370] sm:$0xff]
    %v195 = vld [vmem:[#allocation7 + $0x378] sm:$0xff]
    %v196 = vld [vmem:[#allocation7 + $0x380] sm:$0xff]
    %v197 = vld [vmem:[#allocation7 + $0x388] sm:$0xff]
    %v198 = vld [vmem:[#allocation7 + $0x390] sm:$0xff]
    %v199 = vld [vmem:[#allocation7 + $0x398] sm:$0xff]
    %v200 = vld [vmem:[#allocation7 + $0x3a0] sm:$0xff]
    %v201 = vld [vmem:[#allocation7 + $0x3a8] sm:$0xff]
    %v202 = vld [vmem:[#allocation7 + $0x3b0] sm:$0xff]
    %v203 = vld [vmem:[#allocation7 + $0x3b8] sm:$0xff]
    %v204 = vld [vmem:[#allocation7 + $0x3c0] sm:$0xff]
    %v205 = vld [vmem:[#allocation7 + $0x3c8] sm:$0xff]
    %v206 = vld [vmem:[#allocation7 + $0x3d0] sm:$0xff]
    %v207 = vld [vmem:[#allocation7 + $0x3d8] sm:$0xff]
    %v208 = vld [vmem:[#allocation7 + $0x3e0] sm:$0xff]
    %v209 = vld [vmem:[#allocation7 + $0x3e8] sm:$0xff]
    %v210 = vld [vmem:[#allocation7 + $0x3f0] sm:$0xff]
    %v211 = vld [vmem:[#allocation7 + $0x3f8] sm:$0xff]
    %v212 = vld [vmem:[#allocation7 + $0x400] sm:$0xff]
    %v213 = vld [vmem:[#allocation7 + $0x408] sm:$0xff]
    %v214 = vld [vmem:[#allocation7 + $0x410] sm:$0xff]
    %v215 = vld [vmem:[#allocation7 + $0x418] sm:$0xff]
    %v216 = vld [vmem:[#allocation7 + $0x420] sm:$0xff]
    %v217 = vld [vmem:[#allocation7 + $0x428] sm:$0xff]
    %v218 = vld [vmem:[#allocation7 + $0x430] sm:$0xff]
    %v219 = vld [vmem:[#allocation7 + $0x438] sm:$0xff]
    %v220 = vld [vmem:[#allocation7 + $0x440] sm:$0xff]
    %v221 = vld [vmem:[#allocation7 + $0x448] sm:$0xff]
    %v222 = vld [vmem:[#allocation7 + $0x450] sm:$0xff]
    %v223 = vld [vmem:[#allocation7 + $0x458] sm:$0xff]
    %v224 = vld [vmem:[#allocation7 + $0x460] sm:$0xff]
    %v225 = vld [vmem:[#allocation7 + $0x468] sm:$0xff]
    %v226 = vld [vmem:[#allocation7 + $0x470] sm:$0xff]
    %v227 = vld [vmem:[#allocation7 + $0x478] sm:$0xff]
    %v228 = vld [vmem:[#allocation7 + $0x480] sm:$0xff]
    %v229 = vld [vmem:[#allocation7 + $0x488] sm:$0xff]
    %v230 = vld [vmem:[#allocation7 + $0x490] sm:$0xff]
    %v231 = vld [vmem:[#allocation7 + $0x498] sm:$0xff]
    %v232 = vld [vmem:[#allocation7 + $0x4a0] sm:$0xff]
    %v233 = vld [vmem:[#allocation7 + $0x4a8] sm:$0xff]
    %v234 = vld [vmem:[#allocation7 + $0x4b0] sm:$0xff]
    %v235 = vld [vmem:[#allocation7 + $0x4b8] sm:$0xff]
    %v236 = vld [vmem:[#allocation7 + $0x4c0] sm:$0xff]
    %v237 = vld [vmem:[#allocation7 + $0x4c8] sm:$0xff]
    %v238 = vld [vmem:[#allocation7 + $0x4d0] sm:$0xff]
    %v239 = vld [vmem:[#allocation7 + $0x4d8] sm:$0xff]
    %v240 = vld [vmem:[#allocation7 + $0x4e0] sm:$0xff]
    %v241 = vld [vmem:[#allocation7 + $0x4e8] sm:$0xff]
    %v242 = vld [vmem:[#allocation7 + $0x4f0] sm:$0xff]
    %v243 = vld [vmem:[#allocation7 + $0x4f8] sm:$0xff]
    %v244 = vld [vmem:[#allocation7 + $0x500] sm:$0xff]
    %v245 = vld [vmem:[#allocation7 + $0x508] sm:$0xff]
    %v246 = vld [vmem:[#allocation7 + $0x510] sm:$0xff]
    %v247 = vld [vmem:[#allocation7 + $0x518] sm:$0xff]
    %v248 = vld [vmem:[#allocation7 + $0x520] sm:$0xff]
    %v249 = vld [vmem:[#allocation7 + $0x528] sm:$0xff]
    %v250 = vld [vmem:[#allocation7 + $0x530] sm:$0xff]
    %v251 = vld [vmem:[#allocation7 + $0x538] sm:$0xff]
    %v252 = vld [vmem:[#allocation7 + $0x540] sm:$0xff]
    %v253 = vld [vmem:[#allocation7 + $0x548] sm:$0xff]
    %v254 = vld [vmem:[#allocation7 + $0x550] sm:$0xff]
    %v255 = vld [vmem:[#allocation7 + $0x558] sm:$0xff]
    %v256 = vld [vmem:[#allocation7 + $0x560] sm:$0xff]
    %v257 = vld [vmem:[#allocation7 + $0x568] sm:$0xff]
    %v258 = vld [vmem:[#allocation7 + $0x570] sm:$0xff]
    %v259 = vld [vmem:[#allocation7 + $0x578] sm:$0xff]
    %v260 = vld [vmem:[#allocation7 + $0x580] sm:$0xff]
    %v261 = vld [vmem:[#allocation7 + $0x588] sm:$0xff]
    %v262 = vld [vmem:[#allocation7 + $0x590] sm:$0xff]
    %v263 = vld [vmem:[#allocation7 + $0x598] sm:$0xff]
    %v264 = vld [vmem:[#allocation7 + $0x5a0] sm:$0xff]
    %v265 = vld [vmem:[#allocation7 + $0x5a8] sm:$0xff]
    %v266 = vld [vmem:[#allocation7 + $0x5b0] sm:$0xff]
    %v267 = vld [vmem:[#allocation7 + $0x5b8] sm:$0xff]
    %v268 = vld [vmem:[#allocation7 + $0x5c0] sm:$0xff]
    %v269 = vld [vmem:[#allocation7 + $0x5c8] sm:$0xff]
    %v270 = vld [vmem:[#allocation7 + $0x5d0] sm:$0xff]
    %v271 = vld [vmem:[#allocation7 + $0x5d8] sm:$0xff]
    %v272 = vld [vmem:[#allocation7 + $0x5e0] sm:$0xff]
    %v273 = vld [vmem:[#allocation7 + $0x5e8] sm:$0xff]
    %v274 = vld [vmem:[#allocation7 + $0x5f0] sm:$0xff]
    %v275 = vld [vmem:[#allocation7 + $0x5f8] sm:$0xff]
    %v276 = vld [vmem:[#allocation5] sm:$0xf]
    %v277 = vld [vmem:[#allocation8] sm:$0xff]
    %v278 = vld [vmem:[#allocation8 + $0x8] sm:$0xff]
    %v279 = vld [vmem:[#allocation8 + $0x10] sm:$0xff]
    %v280 = vld [vmem:[#allocation8 + $0x18] sm:$0xff]
    %v281 = vld [vmem:[#allocation8 + $0x20] sm:$0xff]
    %v282 = vld [vmem:[#allocation8 + $0x28] sm:$0xff]
    %v283 = vld [vmem:[#allocation8 + $0x30] sm:$0xff]
    %v284 = vld [vmem:[#allocation8 + $0x38] sm:$0xff]
    %v285 = vld [vmem:[#allocation8 + $0x40] sm:$0xff]
    %v286 = vld [vmem:[#allocation8 + $0x48] sm:$0xff]
    %v287 = vld [vmem:[#allocation8 + $0x50] sm:$0xff]
    %v288 = vld [vmem:[#allocation8 + $0x58] sm:$0xff]
    %v289 = vld [vmem:[#allocation8 + $0x60] sm:$0xff]
    %v290 = vld [vmem:[#allocation8 + $0x68] sm:$0xff]
    %v291 = vld [vmem:[#allocation8 + $0x70] sm:$0xff]
    %v292 = vld [vmem:[#allocation8 + $0x78] sm:$0xff]
    %v293 = vld [vmem:[#allocation8 + $0x80] sm:$0xff]
    %v294 = vld [vmem:[#allocation8 + $0x88] sm:$0xff]
    %v295 = vld [vmem:[#allocation8 + $0x90] sm:$0xff]
    %v296 = vld [vmem:[#allocation8 + $0x98] sm:$0xff]
    %v297 = vld [vmem:[#allocation8 + $0xa0] sm:$0xff]
    %v298 = vld [vmem:[#allocation8 + $0xa8] sm:$0xff]
    %v299 = vld [vmem:[#allocation8 + $0xb0] sm:$0xff]
    %v300 = vld [vmem:[#allocation8 + $0xb8] sm:$0xff]
    %v301 = vld [vmem:[#allocation8 + $0xc0] sm:$0xff]
    %v302 = vld [vmem:[#allocation8 + $0xc8] sm:$0xff]
    %v303 = vld [vmem:[#allocation8 + $0xd0] sm:$0xff]
    %v304 = vld [vmem:[#allocation8 + $0xd8] sm:$0xff]
    %v305 = vld [vmem:[#allocation8 + $0xe0] sm:$0xff]
    %v306 = vld [vmem:[#allocation8 + $0xe8] sm:$0xff]
    %v307 = vld [vmem:[#allocation8 + $0xf0] sm:$0xff]
    %v308 = vld [vmem:[#allocation8 + $0xf8] sm:$0xff]
    %v309 = vld [vmem:[#allocation8 + $0x100] sm:$0xff]
    %v310 = vld [vmem:[#allocation8 + $0x108] sm:$0xff]
    %v311 = vld [vmem:[#allocation8 + $0x110] sm:$0xff]
    %v312 = vld [vmem:[#allocation8 + $0x118] sm:$0xff]
    %v313 = vld [vmem:[#allocation8 + $0x120] sm:$0xff]
    %v314 = vld [vmem:[#allocation8 + $0x128] sm:$0xff]
    %v315 = vld [vmem:[#allocation8 + $0x130] sm:$0xff]
    %v316 = vld [vmem:[#allocation8 + $0x138] sm:$0xff]
    %v317 = vld [vmem:[#allocation8 + $0x140] sm:$0xff]
    %v318 = vld [vmem:[#allocation8 + $0x148] sm:$0xff]
    %v319 = vld [vmem:[#allocation8 + $0x150] sm:$0xff]
    %v320 = vld [vmem:[#allocation8 + $0x158] sm:$0xff]
    %v321 = vld [vmem:[#allocation8 + $0x160] sm:$0xff]
    %v322 = vld [vmem:[#allocation8 + $0x168] sm:$0xff]
    %v323 = vld [vmem:[#allocation8 + $0x170] sm:$0xff]
    %v324 = vld [vmem:[#allocation8 + $0x178] sm:$0xff]
    %v325 = vld [vmem:[#allocation8 + $0x180] sm:$0xff]
    %v326 = vld [vmem:[#allocation8 + $0x188] sm:$0xff]
    %v327 = vld [vmem:[#allocation8 + $0x190] sm:$0xff]
    %v328 = vld [vmem:[#allocation8 + $0x198] sm:$0xff]
    %v329 = vld [vmem:[#allocation8 + $0x1a0] sm:$0xff]
    %v330 = vld [vmem:[#allocation8 + $0x1a8] sm:$0xff]
    %v331 = vld [vmem:[#allocation8 + $0x1b0] sm:$0xff]
    %v332 = vld [vmem:[#allocation8 + $0x1b8] sm:$0xff]
    %v333 = vld [vmem:[#allocation8 + $0x1c0] sm:$0xff]
    %v334 = vld [vmem:[#allocation8 + $0x1c8] sm:$0xff]
    %v335 = vld [vmem:[#allocation8 + $0x1d0] sm:$0xff]
    %v336 = vld [vmem:[#allocation8 + $0x1d8] sm:$0xff]
    %v337 = vld [vmem:[#allocation8 + $0x1e0] sm:$0xff]
    %v338 = vld [vmem:[#allocation8 + $0x1e8] sm:$0xff]
    %v339 = vld [vmem:[#allocation8 + $0x1f0] sm:$0xff]
    %v340 = vld [vmem:[#allocation8 + $0x1f8] sm:$0xff]
    %v341 = vld [vmem:[#allocation8 + $0x200] sm:$0xff]
    %v342 = vld [vmem:[#allocation8 + $0x208] sm:$0xff]
    %v343 = vld [vmem:[#allocation8 + $0x210] sm:$0xff]
    %v344 = vld [vmem:[#allocation8 + $0x218] sm:$0xff]
    %v345 = vld [vmem:[#allocation8 + $0x220] sm:$0xff]
    %v346 = vld [vmem:[#allocation8 + $0x228] sm:$0xff]
    %v347 = vld [vmem:[#allocation8 + $0x230] sm:$0xff]
    %v348 = vld [vmem:[#allocation8 + $0x238] sm:$0xff]
    %v349 = vld [vmem:[#allocation8 + $0x240] sm:$0xff]
    %v350 = vld [vmem:[#allocation8 + $0x248] sm:$0xff]
    %v351 = vld [vmem:[#allocation8 + $0x250] sm:$0xff]
    %v352 = vld [vmem:[#allocation8 + $0x258] sm:$0xff]
    %v353 = vld [vmem:[#allocation8 + $0x260] sm:$0xff]
    %v354 = vld [vmem:[#allocation8 + $0x268] sm:$0xff]
    %v355 = vld [vmem:[#allocation8 + $0x270] sm:$0xff]
    %v356 = vld [vmem:[#allocation8 + $0x278] sm:$0xff]
    %v357 = vld [vmem:[#allocation8 + $0x280] sm:$0xff]
    %v358 = vld [vmem:[#allocation8 + $0x288] sm:$0xff]
    %v359 = vld [vmem:[#allocation8 + $0x290] sm:$0xff]
    %v360 = vld [vmem:[#allocation8 + $0x298] sm:$0xff]
    %v361 = vld [vmem:[#allocation8 + $0x2a0] sm:$0xff]
    %v362 = vld [vmem:[#allocation8 + $0x2a8] sm:$0xff]
    %v363 = vld [vmem:[#allocation8 + $0x2b0] sm:$0xff]
    %v364 = vld [vmem:[#allocation8 + $0x2b8] sm:$0xff]
    %v365 = vld [vmem:[#allocation8 + $0x2c0] sm:$0xff]
    %v366 = vld [vmem:[#allocation8 + $0x2c8] sm:$0xff]
    %v367 = vld [vmem:[#allocation8 + $0x2d0] sm:$0xff]
    %v368 = vld [vmem:[#allocation8 + $0x2d8] sm:$0xff]
    %v369 = vld [vmem:[#allocation8 + $0x2e0] sm:$0xff]
    %v370 = vld [vmem:[#allocation8 + $0x2e8] sm:$0xff]
    %v371 = vld [vmem:[#allocation8 + $0x2f0] sm:$0xff]
    %v372 = vld [vmem:[#allocation8 + $0x2f8] sm:$0xff]
    %373 = vmatpush.msra.mxu0 %v367
    %374 = vmatpush.msra.mxu0 %v361
    %375 = vmatpush.msra.mxu0 %v355
    %376 = vmatpush.msra.mxu0 %v349
    %377 = vmatpush.msra.mxu0 %v343
    %378 = vmatpush.msra.mxu0 %v337
    %379 = vmatpush.msra.mxu0 %v331
    %380 = vmatpush.msra.mxu0 %v325
    %381 = vmatpush.msra.mxu0 %v319
    %382 = vmatpush.msra.mxu0 %v313
    %383 = vmatpush.msra.mxu0 %v307
    %384 = vmatpush.msra.mxu0 %v301
    %385 = vmatpush.msra.mxu0 %v295
    %386 = vmatpush.msra.mxu0 %v289
    %387 = vmatpush.msra.mxu0 %v283
    %388 = vmatpush.msra.mxu0 %v277
    %389 = vmatmul.f32.gmra.mxu0 %v276
    %v390 = vpop.f32.mrf.mxu0
    %v391 = vadd.f32 0.0, %v390
    %392 = vdwg.mxu0
    %393 = vmatpush.msra.mxu0 %v368
    %394 = vmatpush.msra.mxu0 %v362
    %395 = vmatpush.msra.mxu0 %v356
    %396 = vmatpush.msra.mxu0 %v350
    %397 = vmatpush.msra.mxu0 %v344
    %398 = vmatpush.msra.mxu0 %v338
    %399 = vmatpush.msra.mxu0 %v332
    %400 = vmatpush.msra.mxu0 %v326
    %401 = vmatpush.msra.mxu0 %v320
    %402 = vmatpush.msra.mxu0 %v314
    %403 = vmatpush.msra.mxu0 %v308
    %404 = vmatpush.msra.mxu0 %v302
    %405 = vmatpush.msra.mxu0 %v296
    %406 = vmatpush.msra.mxu0 %v290
    %407 = vmatpush.msra.mxu0 %v284
    %408 = vmatpush.msra.mxu0 %v278
    %409 = vmatmul.f32.gmra.mxu0 %v276
    %v410 = vpop.f32.mrf.mxu0
    %v411 = vadd.f32 0.0, %v410
    %412 = vdwg.mxu0
    %413 = vmatpush.msra.mxu0 %v369
    %414 = vmatpush.msra.mxu0 %v363
    %415 = vmatpush.msra.mxu0 %v357
    %416 = vmatpush.msra.mxu0 %v351
    %417 = vmatpush.msra.mxu0 %v345
    %418 = vmatpush.msra.mxu0 %v339
    %419 = vmatpush.msra.mxu0 %v333
    %420 = vmatpush.msra.mxu0 %v327
    %421 = vmatpush.msra.mxu0 %v321
    %422 = vmatpush.msra.mxu0 %v315
    %423 = vmatpush.msra.mxu0 %v309
    %424 = vmatpush.msra.mxu0 %v303
    %425 = vmatpush.msra.mxu0 %v297
    %426 = vmatpush.msra.mxu0 %v291
    %427 = vmatpush.msra.mxu0 %v285
    %428 = vmatpush.msra.mxu0 %v279
    %429 = vmatmul.f32.gmra.mxu0 %v276
    %v430 = vpop.f32.mrf.mxu0
    %v431 = vadd.f32 0.0, %v430
    %432 = vdwg.mxu0
    %433 = vmatpush.msra.mxu0 %v370
    %434 = vmatpush.msra.mxu0 %v364
    %435 = vmatpush.msra.mxu0 %v358
    %436 = vmatpush.msra.mxu0 %v352
    %437 = vmatpush.msra.mxu0 %v346
    %438 = vmatpush.msra.mxu0 %v340
    %439 = vmatpush.msra.mxu0 %v334
    %440 = vmatpush.msra.mxu0 %v328
    %441 = vmatpush.msra.mxu0 %v322
    %442 = vmatpush.msra.mxu0 %v316
    %443 = vmatpush.msra.mxu0 %v310
    %444 = vmatpush.msra.mxu0 %v304
    %445 = vmatpush.msra.mxu0 %v298
    %446 = vmatpush.msra.mxu0 %v292
    %447 = vmatpush.msra.mxu0 %v286
    %448 = vmatpush.msra.mxu0 %v280
    %449 = vmatmul.f32.gmra.mxu0 %v276
    %v450 = vpop.f32.mrf.mxu0
    %v451 = vadd.f32 0.0, %v450
    %452 = vdwg.mxu0
    %453 = vmatpush.msra.mxu0 %v371
    %454 = vmatpush.msra.mxu0 %v365
    %455 = vmatpush.msra.mxu0 %v359
    %456 = vmatpush.msra.mxu0 %v353
    %457 = vmatpush.msra.mxu0 %v347
    %458 = vmatpush.msra.mxu0 %v341
    %459 = vmatpush.msra.mxu0 %v335
    %460 = vmatpush.msra.mxu0 %v329
    %461 = vmatpush.msra.mxu0 %v323
    %462 = vmatpush.msra.mxu0 %v317
    %463 = vmatpush.msra.mxu0 %v311
    %464 = vmatpush.msra.mxu0 %v305
    %465 = vmatpush.msra.mxu0 %v299
    %466 = vmatpush.msra.mxu0 %v293
    %467 = vmatpush.msra.mxu0 %v287
    %468 = vmatpush.msra.mxu0 %v281
    %469 = vmatmul.f32.gmra.mxu0 %v276
    %v470 = vpop.f32.mrf.mxu0
    %v471 = vadd.f32 0.0, %v470
    %472 = vdwg.mxu0
    %473 = vmatpush.msra.mxu0 %v372
    %474 = vmatpush.msra.mxu0 %v366
    %475 = vmatpush.msra.mxu0 %v360
    %476 = vmatpush.msra.mxu0 %v354
    %477 = vmatpush.msra.mxu0 %v348
    %478 = vmatpush.msra.mxu0 %v342
    %479 = vmatpush.msra.mxu0 %v336
    %480 = vmatpush.msra.mxu0 %v330
    %481 = vmatpush.msra.mxu0 %v324
    %482 = vmatpush.msra.mxu0 %v318
    %483 = vmatpush.msra.mxu0 %v312
    %484 = vmatpush.msra.mxu0 %v306
    %485 = vmatpush.msra.mxu0 %v300
    %486 = vmatpush.msra.mxu0 %v294
    %487 = vmatpush.msra.mxu0 %v288
    %488 = vmatpush.msra.mxu0 %v282
    %489 = vmatmul.f32.gmra.mxu0 %v276
    %v490 = vpop.f32.mrf.mxu0
    %v491 = vadd.f32 0.0, %v490
    %492 = vdwg.mxu0
    %494 = vst [vmem:[#allocation1] ss:$2 sm:$0xff] %v83
    %v495 = vld.sshfl [vmem:[#allocation1] sm:$0xff pattern:$0x75316420]
    %v496 = vld.sshfl [vmem:[#allocation1 + $0x8] sm:$0xff pattern:$0x75316420]
    %499 = vmatpush.msra.mxu0 %v174
    %500 = vmatpush.msra.mxu0 %v168
    %501 = vmatpush.msra.mxu0 %v162
    %502 = vmatpush.msra.mxu0 %v156
    %503 = vmatpush.msra.mxu0 %v150
    %504 = vmatpush.msra.mxu0 %v144
    %505 = vmatpush.msra.mxu0 %v138
    %506 = vmatpush.msra.mxu0 %v132
    %507 = vmatpush.msra.mxu0 %v126
    %508 = vmatpush.msra.mxu0 %v120
    %509 = vmatpush.msra.mxu0 %v114
    %510 = vmatpush.msra.mxu0 %v108
    %511 = vmatpush.msra.mxu0 %v102
    %512 = vmatpush.msra.mxu0 %v96
    %513 = vmatpush.msra.mxu0 %v90
    %514 = vmatpush.msra.mxu0 %v84
    %515 = vmatmul.f32.gmra.mxu0 %v495
    %v516 = vpop.f32.mrf.mxu0
    %v517 = vadd.f32 %v391, %v516
    %518 = vdwg.mxu0
    %519 = vmatpush.msra.mxu0 %v270
    %520 = vmatpush.msra.mxu0 %v264
    %521 = vmatpush.msra.mxu0 %v258
    %522 = vmatpush.msra.mxu0 %v252
    %523 = vmatpush.msra.mxu0 %v246
    %524 = vmatpush.msra.mxu0 %v240
    %525 = vmatpush.msra.mxu0 %v234
    %526 = vmatpush.msra.mxu0 %v228
    %527 = vmatpush.msra.mxu0 %v222
    %528 = vmatpush.msra.mxu0 %v216
    %529 = vmatpush.msra.mxu0 %v210
    %530 = vmatpush.msra.mxu0 %v204
    %531 = vmatpush.msra.mxu0 %v198
    %532 = vmatpush.msra.mxu0 %v192
    %533 = vmatpush.msra.mxu0 %v186
    %534 = vmatpush.msra.mxu0 %v180
    %535 = vmatmul.f32.gmra.mxu0 %v496
    %v536 = vpop.f32.mrf.mxu0
    %v537 = vadd.f32 %v517, %v536
    %538 = vdwg.mxu0
    %539 = vmatpush.msra.mxu0 %v175
    %540 = vmatpush.msra.mxu0 %v169
    %541 = vmatpush.msra.mxu0 %v163
    %542 = vmatpush.msra.mxu0 %v157
    %543 = vmatpush.msra.mxu0 %v151
    %544 = vmatpush.msra.mxu0 %v145
    %545 = vmatpush.msra.mxu0 %v139
    %546 = vmatpush.msra.mxu0 %v133
    %547 = vmatpush.msra.mxu0 %v127
    %548 = vmatpush.msra.mxu0 %v121
    %549 = vmatpush.msra.mxu0 %v115
    %550 = vmatpush.msra.mxu0 %v109
    %551 = vmatpush.msra.mxu0 %v103
    %552 = vmatpush.msra.mxu0 %v97
    %553 = vmatpush.msra.mxu0 %v91
    %554 = vmatpush.msra.mxu0 %v85
    %555 = vmatmul.f32.gmra.mxu0 %v495
    %v556 = vpop.f32.mrf.mxu0
    %v557 = vadd.f32 %v411, %v556
    %558 = vdwg.mxu0
    %559 = vmatpush.msra.mxu0 %v271
    %560 = vmatpush.msra.mxu0 %v265
    %561 = vmatpush.msra.mxu0 %v259
    %562 = vmatpush.msra.mxu0 %v253
    %563 = vmatpush.msra.mxu0 %v247
    %564 = vmatpush.msra.mxu0 %v241
    %565 = vmatpush.msra.mxu0 %v235
    %566 = vmatpush.msra.mxu0 %v229
    %567 = vmatpush.msra.mxu0 %v223
    %568 = vmatpush.msra.mxu0 %v217
    %569 = vmatpush.msra.mxu0 %v211
    %570 = vmatpush.msra.mxu0 %v205
    %571 = vmatpush.msra.mxu0 %v199
    %572 = vmatpush.msra.mxu0 %v193
    %573 = vmatpush.msra.mxu0 %v187
    %574 = vmatpush.msra.mxu0 %v181
    %575 = vmatmul.f32.gmra.mxu0 %v496
    %v576 = vpop.f32.mrf.mxu0
    %v577 = vadd.f32 %v557, %v576
    %578 = vdwg.mxu0
    %579 = vmatpush.msra.mxu0 %v176
    %580 = vmatpush.msra.mxu0 %v170
    %581 = vmatpush.msra.mxu0 %v164
    %582 = vmatpush.msra.mxu0 %v158
    %583 = vmatpush.msra.mxu0 %v152
    %584 = vmatpush.msra.mxu0 %v146
    %585 = vmatpush.msra.mxu0 %v140
    %586 = vmatpush.msra.mxu0 %v134
    %587 = vmatpush.msra.mxu0 %v128
    %588 = vmatpush.msra.mxu0 %v122
    %589 = vmatpush.msra.mxu0 %v116
    %590 = vmatpush.msra.mxu0 %v110
    %591 = vmatpush.msra.mxu0 %v104
    %592 = vmatpush.msra.mxu0 %v98
    %593 = vmatpush.msra.mxu0 %v92
    %594 = vmatpush.msra.mxu0 %v86
    %595 = vmatmul.f32.gmra.mxu0 %v495
    %v596 = vpop.f32.mrf.mxu0
    %v597 = vadd.f32 %v431, %v596
    %598 = vdwg.mxu0
    %599 = vmatpush.msra.mxu0 %v272
    %600 = vmatpush.msra.mxu0 %v266
    %601 = vmatpush.msra.mxu0 %v260
    %602 = vmatpush.msra.mxu0 %v254
    %603 = vmatpush.msra.mxu0 %v248
    %604 = vmatpush.msra.mxu0 %v242
    %605 = vmatpush.msra.mxu0 %v236
    %606 = vmatpush.msra.mxu0 %v230
    %607 = vmatpush.msra.mxu0 %v224
    %608 = vmatpush.msra.mxu0 %v218
    %609 = vmatpush.msra.mxu0 %v212
    %610 = vmatpush.msra.mxu0 %v206
    %611 = vmatpush.msra.mxu0 %v200
    %612 = vmatpush.msra.mxu0 %v194
    %613 = vmatpush.msra.mxu0 %v188
    %614 = vmatpush.msra.mxu0 %v182
    %615 = vmatmul.f32.gmra.mxu0 %v496
    %v616 = vpop.f32.mrf.mxu0
    %v617 = vadd.f32 %v597, %v616
    %618 = vdwg.mxu0
    %619 = vmatpush.msra.mxu0 %v177
    %620 = vmatpush.msra.mxu0 %v171
    %621 = vmatpush.msra.mxu0 %v165
    %622 = vmatpush.msra.mxu0 %v159
    %623 = vmatpush.msra.mxu0 %v153
    %624 = vmatpush.msra.mxu0 %v147
    %625 = vmatpush.msra.mxu0 %v141
    %626 = vmatpush.msra.mxu0 %v135
    %627 = vmatpush.msra.mxu0 %v129
    %628 = vmatpush.msra.mxu0 %v123
    %629 = vmatpush.msra.mxu0 %v117
    %630 = vmatpush.msra.mxu0 %v111
    %631 = vmatpush.msra.mxu0 %v105
    %632 = vmatpush.msra.mxu0 %v99
    %633 = vmatpush.msra.mxu0 %v93
    %634 = vmatpush.msra.mxu0 %v87
    %635 = vmatmul.f32.gmra.mxu0 %v495
    %v636 = vpop.f32.mrf.mxu0
    %v637 = vadd.f32 %v451, %v636
    %638 = vdwg.mxu0
    %639 = vmatpush.msra.mxu0 %v273
    %640 = vmatpush.msra.mxu0 %v267
    %641 = vmatpush.msra.mxu0 %v261
    %642 = vmatpush.msra.mxu0 %v255
    %643 = vmatpush.msra.mxu0 %v249
    %644 = vmatpush.msra.mxu0 %v243
    %645 = vmatpush.msra.mxu0 %v237
    %646 = vmatpush.msra.mxu0 %v231
    %647 = vmatpush.msra.mxu0 %v225
    %648 = vmatpush.msra.mxu0 %v219
    %649 = vmatpush.msra.mxu0 %v213
    %650 = vmatpush.msra.mxu0 %v207
    %651 = vmatpush.msra.mxu0 %v201
    %652 = vmatpush.msra.mxu0 %v195
    %653 = vmatpush.msra.mxu0 %v189
    %654 = vmatpush.msra.mxu0 %v183
    %655 = vmatmul.f32.gmra.mxu0 %v496
    %v656 = vpop.f32.mrf.mxu0
    %v657 = vadd.f32 %v637, %v656
    %658 = vdwg.mxu0
    %659 = vmatpush.msra.mxu0 %v178
    %660 = vmatpush.msra.mxu0 %v172
    %661 = vmatpush.msra.mxu0 %v166
    %662 = vmatpush.msra.mxu0 %v160
    %663 = vmatpush.msra.mxu0 %v154
    %664 = vmatpush.msra.mxu0 %v148
    %665 = vmatpush.msra.mxu0 %v142
    %666 = vmatpush.msra.mxu0 %v136
    %667 = vmatpush.msra.mxu0 %v130
    %668 = vmatpush.msra.mxu0 %v124
    %669 = vmatpush.msra.mxu0 %v118
    %670 = vmatpush.msra.mxu0 %v112
    %671 = vmatpush.msra.mxu0 %v106
    %672 = vmatpush.msra.mxu0 %v100
    %673 = vmatpush.msra.mxu0 %v94
    %674 = vmatpush.msra.mxu0 %v88
    %675 = vmatmul.f32.gmra.mxu0 %v495
    %v676 = vpop.f32.mrf.mxu0
    %v677 = vadd.f32 %v471, %v676
    %678 = vdwg.mxu0
    %679 = vmatpush.msra.mxu0 %v274
    %680 = vmatpush.msra.mxu0 %v268
    %681 = vmatpush.msra.mxu0 %v262
    %682 = vmatpush.msra.mxu0 %v256
    %683 = vmatpush.msra.mxu0 %v250
    %684 = vmatpush.msra.mxu0 %v244
    %685 = vmatpush.msra.mxu0 %v238
    %686 = vmatpush.msra.mxu0 %v232
    %687 = vmatpush.msra.mxu0 %v226
    %688 = vmatpush.msra.mxu0 %v220
    %689 = vmatpush.msra.mxu0 %v214
    %690 = vmatpush.msra.mxu0 %v208
    %691 = vmatpush.msra.mxu0 %v202
    %692 = vmatpush.msra.mxu0 %v196
    %693 = vmatpush.msra.mxu0 %v190
    %694 = vmatpush.msra.mxu0 %v184
    %695 = vmatmul.f32.gmra.mxu0 %v496
    %v696 = vpop.f32.mrf.mxu0
    %v697 = vadd.f32 %v677, %v696
    %698 = vdwg.mxu0
    %699 = vmatpush.msra.mxu0 %v179
    %700 = vmatpush.msra.mxu0 %v173
    %701 = vmatpush.msra.mxu0 %v167
    %702 = vmatpush.msra.mxu0 %v161
    %703 = vmatpush.msra.mxu0 %v155
    %704 = vmatpush.msra.mxu0 %v149
    %705 = vmatpush.msra.mxu0 %v143
    %706 = vmatpush.msra.mxu0 %v137
    %707 = vmatpush.msra.mxu0 %v131
    %708 = vmatpush.msra.mxu0 %v125
    %709 = vmatpush.msra.mxu0 %v119
    %710 = vmatpush.msra.mxu0 %v113
    %711 = vmatpush.msra.mxu0 %v107
    %712 = vmatpush.msra.mxu0 %v101
    %713 = vmatpush.msra.mxu0 %v95
    %714 = vmatpush.msra.mxu0 %v89
    %715 = vmatmul.f32.gmra.mxu0 %v495
    %v716 = vpop.f32.mrf.mxu0
    %v717 = vadd.f32 %v491, %v716
    %718 = vdwg.mxu0
    %719 = vmatpush.msra.mxu0 %v275
    %720 = vmatpush.msra.mxu0 %v269
    %721 = vmatpush.msra.mxu0 %v263
    %722 = vmatpush.msra.mxu0 %v257
    %723 = vmatpush.msra.mxu0 %v251
    %724 = vmatpush.msra.mxu0 %v245
    %725 = vmatpush.msra.mxu0 %v239
    %726 = vmatpush.msra.mxu0 %v233
    %727 = vmatpush.msra.mxu0 %v227
    %728 = vmatpush.msra.mxu0 %v221
    %729 = vmatpush.msra.mxu0 %v215
    %730 = vmatpush.msra.mxu0 %v209
    %731 = vmatpush.msra.mxu0 %v203
    %732 = vmatpush.msra.mxu0 %v197
    %733 = vmatpush.msra.mxu0 %v191
    %734 = vmatpush.msra.mxu0 %v185
    %735 = vmatmul.f32.gmra.mxu0 %v496
    %v736 = vpop.f32.mrf.mxu0
    %v737 = vadd.f32 %v717, %v736
    %738 = vdwg.mxu0
    %v745 = vrot.slane %v577, 4
    %v746 = vrot.slane %v657, 4
    %v747 = vrot.slane %v737, 4
    %vm748 = vcmask 1043456
    %v749 = vsel %vm748, %v537, %v745
    %v750 = vsel %vm748, %v617, %v746
    %v751 = vsel %vm748, %v697, %v747
    %755 = vst [vmem:[#allocation10] sm:$0xff] %v749
    %756 = vst [vmem:[#allocation10 + $0x8] sm:$0xff] %v750
    %757 = vst [vmem:[#allocation10 + $0x10] sm:$0xff] %v751
    // Predicated region
    $region34: #{tpu_custom_call.1} parent=1 // pred_check
      _
    $region35: #{tpu_custom_call.1} parent=1 // pred_check_branch
      %759 = sbr.rel (0) target = $region37
    $region36: #{tpu_custom_call.1} parent=1 // pred_region
      %761 = vsyncadd [#allocation4], 0
      %s763 = sshll.u32 [#allocation10], 4
      %s764 = int_to_ptr.vmem [resolvable:$true] %s763
      %s765 = sshll.u32 %s4, 4
      %s766 = int_to_ptr.hbm [resolvable:$true] %s765
      %768 = dma.vmem_to_hbm [thread:$0]  %s764, 384, %s766, [#allocation4]
    $region37: #{tpu_custom_call.1} parent=1 // pred_fallthru
      _
    // Predicated region
    $region38: #{tpu_custom_call.1} parent=1 // pred_check
      _
    $region39: #{tpu_custom_call.1} parent=1 // pred_check_branch
      %770 = sbr.rel (0) target = $region41
    $region40: #{tpu_custom_call.1} parent=1 // pred_region
      %772 = dma.done [#allocation4], 384
    $region41: #{tpu_custom_call.1} parent=1 // pred_fallthru
      _
    %773 = vsyncpa [#allocation3], 1
    %774 = vsyncpa [#allocation6], 1
    %775 = vsyncpa [#allocation9], 1
    %776 = vsyncpa [#allocation4], 1

</llo_original>
